<compile_context>
chip_gen: v7x
topology: tpu7x:2x2x1
jax: 0.10.0
libtpu: 0.0.40
codegen_flags: <defaults>
</compile_context>

<pallas_src>
import functools

import jax
import jax.numpy as jnp
import numpy as np
from jax.experimental import pallas as pl
from jax.experimental.pallas import tpu as pltpu

EPS = 1e-6


# --------------------------------------------------------------------- helpers
def _round_up(x, m):
    return (x + m - 1) // m * m


def _vmem_budgets():
    """(scoped vmem_limit_bytes, tile-sizing budget), generation aware."""
    cap = 64 * 1024 * 1024                       # conservative default (v7x per-TC)
    try:
        cap = int(pltpu.get_tpu_info().vmem_capacity_bytes)
    except Exception:
        pass
    vmem_limit = min(int(cap * 0.75), 100 * 1024 * 1024)   # 96 MiB on v5e/v6e, 48 MiB on v7x
    tile_budget = int(vmem_limit * 0.7)                      # headroom for compiler scratch
    return vmem_limit, tile_budget


def _pick_tiles(n, d, x_item, w_item, tile_budget):
    """Pick (TM, TN) for the fused LN+Linear+residual kernel.

    TN: lane-dense (multiple of 128) column slab of W when D % 128 == 0, sized so
        the double-buffered (D, TN) slab stays well under the budget.
    TM: MXU-friendly row tile, sized against the *actual* VMEM residency:
        double-buffered x row tile, x residual slab, out tile, LN scratch,
        and the f32 temporaries live during the LayerNorm phase.
    """
    tn = d
    if d % 128 == 0:
        tn = 128
        for c in (512, 256, 128):
            if d % c == 0 and 2 * d * c * w_item <= max(tile_budget // 3, 1):
                tn = c
                break

    resident = 2 * d * tn * w_item + 2 * tn * 4 + 4 * d * 4   # W slab (x2), bias, a_2/b_2
    avail = max(tile_budget - resident, 0)
    tm = 8
    for c in (1024, 512, 256, 128, 64, 32, 16, 8):
        cost = (2 * c * d * x_item        # x row tile (double-buffered)
                + 2 * c * tn * x_item     # x residual slab (double-buffered)
                + 2 * c * tn * x_item     # out tile (double-buffered)
                + c * d * w_item          # LN scratch (w dtype)
                + 3 * c * d * 4)          # f32 temporaries during the LN phase
        if cost <= avail:
            tm = c
            break
    tm = min(tm, _round_up(n, 8))          # don't over-pad tiny inputs
    return max(tm, 8), tn


def _pick_row_tile(n, d, itemsize, tile_budget):
    tm = 8
    for t in (2048, 1024, 512, 256, 128, 64, 32, 16, 8):
        if 4 * t * d * itemsize + 3 * t * d * 4 <= tile_budget:
            tm = t
            break
    return max(min(tm, _round_up(n, 8)), 8)


def _layernorm_f32(x_f32, a_f32, b_f32):
    # Matches the reference module: unbiased std (D-1) and eps added to std.
    # Exact divide (approx EUP reciprocal previously exceeded the tolerance).
    d = x_f32.shape[-1]
    mean = jnp.mean(x_f32, axis=-1, keepdims=True)
    centered = x_f32 - mean
    var = jnp.sum(centered * centered, axis=-1, keepdims=True) / (d - 1)
    std = jnp.sqrt(var)
    return a_f32 * centered / (std + EPS) + b_f32


# ------------------------------------------------------------------ fused path
def fused_ln_linear_residual_kernel(x_row_ref, x_res_ref, a_ref, b_ref,
                                    w_ref, bias_ref, o_ref, normed_ref):
    # Column axis (axis 1) is the inner grid loop; LayerNorm the row tile once
    # per row tile and reuse the VMEM scratch across all column slabs.
    @pl.when(pl.program_id(1) == 0)
    def _():
        x = x_row_ref[...].astype(jnp.float32)
        normed_ref[...] = _layernorm_f32(
            x,
            a_ref[...].astype(jnp.float32),
            b_ref[...].astype(jnp.float32),
        ).astype(normed_ref.dtype)

    # MXU matmul of the LN scratch (in the weight dtype) with a (D, TN) W slab.
    y = jnp.dot(normed_ref[...], w_ref[...], preferred_element_type=jnp.float32)
    y = y + bias_ref[...].astype(jnp.float32)
    # Residual add reads its own (TM, TN) VMEM slab of x (no f32 copy of x kept
    # live across the matmul).
    o_ref[...] = (x_res_ref[...].astype(jnp.float32) + y).astype(o_ref.dtype)


def sublayer_connection_linear(x, w, bias, a_2, b_2, *, tile_m=None, tile_n=None):
    """Fused x + Linear(LayerNorm(x))  (eval-mode dropout).  x: (..., D).

    W may be bf16 for full-rate MXU on v6e/v7x (LN math stays in f32, f32 accum).
    For best store performance keep D a multiple of 128 (lane-dense outputs).
    """
    orig_shape = x.shape
    d = orig_shape[-1]
    x2d = x.reshape(-1, d)
    n = x2d.shape[0]
    x_item = jnp.dtype(x.dtype).itemsize
    w_item = jnp.dtype(w.dtype).itemsize

    vmem_limit, tile_budget = _vmem_budgets()
    tm, tn = _pick_tiles(n, d, x_item, w_item, tile_budget)
    if tile_m is not None:
        tm = tile_m
    if tile_n is not None:
        tn = tile_n

    n_pad = _round_up(n, tm)
    xp = jnp.pad(x2d, ((0, n_pad - n), (0, 0))) if n_pad != n else x2d

    out = pl.pallas_call(
        fused_ln_linear_residual_kernel,
        out_shape=jax.ShapeDtypeStruct((n_pad, d), x.dtype),
        grid=(n_pad // tm, d // tn),
        in_specs=[
            pl.BlockSpec((tm, d), lambda i, j: (i, 0)),    # x full row (LN); constant over j -> no re-DMA
            pl.BlockSpec((tm, tn), lambda i, j: (i, j)),   # x residual slab
            pl.BlockSpec((1, d), lambda i, j: (0, 0)),     # a_2  (VMEM-resident)
            pl.BlockSpec((1, d), lambda i, j: (0, 0)),     # b_2
            pl.BlockSpec((d, tn), lambda i, j: (0, j)),    # W column slab (streamed)
            pl.BlockSpec((1, tn), lambda i, j: (0, j)),    # bias slab
        ],
        out_specs=pl.BlockSpec((tm, tn), lambda i, j: (i, j)),
        scratch_shapes=[pltpu.VMEM((tm, d), w.dtype)],     # LayerNorm result, reused over j
        compiler_params=pltpu.CompilerParams(
            dimension_semantics=("parallel", "arbitrary"),
            vmem_limit_bytes=vmem_limit,
        ),
    )(xp, xp, a_2.reshape(1, d), b_2.reshape(1, d), w, bias.reshape(1, d))

    out = out[:n] if n_pad != n else out
    return out.reshape(orig_shape)


# -------------------------------------------------- generic (arbitrary sublayer)
def layernorm_kernel(x_ref, a_ref, b_ref, o_ref):
    y = _layernorm_f32(x_ref[...].astype(jnp.float32),
                       a_ref[...].astype(jnp.float32),
                       b_ref[...].astype(jnp.float32))
    o_ref[...] = y.astype(o_ref.dtype)


def residual_kernel(x_ref, y_ref, o_ref):
    # eval-mode dropout is the identity, so the residual is a plain add.
    o_ref[...] = x_ref[...] + y_ref[...]


def layer_norm(x2d, a_2, b_2, *, tile_m=None):
    n, d = x2d.shape
    vmem_limit, tile_budget = _vmem_budgets()
    tm = tile_m or _pick_row_tile(n, d, jnp.dtype(x2d.dtype).itemsize, tile_budget)
    n_pad = _round_up(n, tm)
    xp = jnp.pad(x2d, ((0, n_pad - n), (0, 0))) if n_pad != n else x2d
    out = pl.pallas_call(
        layernorm_kernel,
        out_shape=jax.ShapeDtypeStruct((n_pad, d), x2d.dtype),
        grid=(n_pad // tm,),
        in_specs=[pl.BlockSpec((tm, d), lambda i: (i, 0)),
                  pl.BlockSpec((1, d), lambda i: (0, 0)),
                  pl.BlockSpec((1, d), lambda i: (0, 0))],
        out_specs=pl.BlockSpec((tm, d), lambda i: (i, 0)),
        compiler_params=pltpu.CompilerParams(
            dimension_semantics=("parallel",), vmem_limit_bytes=vmem_limit),
    )(xp, a_2.reshape(1, d), b_2.reshape(1, d))
    return out[:n] if n_pad != n else out


def residual_add(x2d, y2d, *, tile_m=None):
    n, d = x2d.shape
    vmem_limit, tile_budget = _vmem_budgets()
    tm = tile_m or _pick_row_tile(n, d, jnp.dtype(x2d.dtype).itemsize, tile_budget)
    n_pad = _round_up(n, tm)
    if n_pad != n:
        x2d = jnp.pad(x2d, ((0, n_pad - n), (0, 0)))
        y2d = jnp.pad(y2d, ((0, n_pad - n), (0, 0)))
    out = pl.pallas_call(
        residual_kernel,
        out_shape=jax.ShapeDtypeStruct((n_pad, d), x2d.dtype),
        grid=(n_pad // tm,),
        in_specs=[pl.BlockSpec((tm, d), lambda i: (i, 0)),
                  pl.BlockSpec((tm, d), lambda i: (i, 0))],
        out_specs=pl.BlockSpec((tm, d), lambda i: (i, 0)),
        compiler_params=pltpu.CompilerParams(
            dimension_semantics=("parallel",), vmem_limit_bytes=vmem_limit),
    )(x2d, y2d)
    return out[:n] if out.shape[0] != n else out


def sublayer_connection(x, sublayer_fn, a_2, b_2):
    """x: (..., D).  Returns x + dropout(sublayer_fn(LayerNorm(x))), eval mode."""
    orig_shape = x.shape
    d = orig_shape[-1]
    x2d = x.reshape(-1, d)
    normed = layer_norm(x2d, a_2, b_2)
    sub = sublayer_fn(normed)
    out = residual_add(x2d, sub.reshape(x2d.shape))
    return out.reshape(orig_shape)


# ------------------------------------------------------------------- reference
def _ref_np(x, w, bias, a_2, b_2):
    """float64 numpy reference of x + Linear(LayerNorm(x))."""
    x64 = np.asarray(x, np.float64)
    w64 = np.asarray(w, np.float64)
    bias64 = np.asarray(bias, np.float64)
    a64 = np.asarray(a_2, np.float64)
    b64 = np.asarray(b_2, np.float64)
    mean = x64.mean(-1, keepdims=True)
    std = x64.std(-1, ddof=1, keepdims=True)       # torch.Tensor.std: unbiased
    normed = a64 * (x64 - mean) / (std + EPS) + b64
    return x64 + normed @ w64 + bias64


if __name__ == "__main__":
    batch, seq, hidden = 2, 8, 32    # NOTE: real models should keep hidden % 128 == 0
    key = jax.random.PRNGKey(0)
    kx, kw, kb = jax.random.split(key, 3)

    x = jax.random.normal(kx, (batch, seq, hidden), dtype=jnp.float32)

    # LayerNorm params exactly as torch init: ones / zeros.
    a_2 = jnp.ones((hidden,), dtype=jnp.float32)
    b_2 = jnp.zeros((hidden,), dtype=jnp.float32)

    # Example sublayer: Linear(hidden, hidden), deterministic init.
    w = jax.random.normal(kw, (hidden, hidden), dtype=jnp.float32) * 0.05
    bias = jax.random.normal(kb, (hidden,), dtype=jnp.float32) * 0.05

    ref = _ref_np(x, w, bias, a_2, b_2)

    # Fused path (sublayer = Linear, f32 weights).
    fused = jax.jit(functools.partial(sublayer_connection_linear,
                                      w=w, bias=bias, a_2=a_2, b_2=b_2))
    out_fused = jax.block_until_ready(fused(x))
    assert out_fused.shape == x.shape
    err_f = float(np.max(np.abs(np.asarray(out_fused, np.float64) - ref)))
    assert err_f < 2e-3, err_f

    # Generic path (arbitrary sublayer_fn).
    sublayer_fn = lambda z: z @ w + bias
    generic = jax.jit(lambda xx: sublayer_connection(xx, sublayer_fn, a_2, b_2))
    out_generic = jax.block_until_ready(generic(x))
    err_g = float(np.max(np.abs(np.asarray(out_generic, np.float64) - ref)))
    assert err_g < 2e-3, err_g

    # bf16-weight fused path (feeds the MXU in bf16, f32 accumulation).
    out_bf16 = jax.block_until_ready(
        sublayer_connection_linear(x, w.astype(jnp.bfloat16),
                                   bias.astype(jnp.bfloat16), a_2, b_2))
    err_b = float(np.max(np.abs(np.asarray(out_bf16, np.float64) - ref)))
    assert err_b < 3e-2, err_b

    print("KERNEL_OK")
</pallas_src>

<mosaic_0001>
module attributes {stable_mosaic.version = 11 : i64} {
  func.func @fused_ln_linear_residual_kernel(%arg0: i32, %arg1: i32, %arg2: memref<16x32xf32, #tpu.memory_space<vmem>>, %arg3: memref<16x32xf32, #tpu.memory_space<vmem>>, %arg4: memref<1x32xf32, #tpu.memory_space<vmem>>, %arg5: memref<1x32xf32, #tpu.memory_space<vmem>>, %arg6: memref<32x32xf32, #tpu.memory_space<vmem>>, %arg7: memref<1x32xf32, #tpu.memory_space<vmem>>, %arg8: memref<16x32xf32, #tpu.memory_space<vmem>>, %arg9: memref<16x32xf32, #tpu.memory_space<vmem>>) attributes {dimension_semantics = [#tpu.dimension_semantics<parallel>, #tpu.dimension_semantics<arbitrary>], iteration_bounds = array<i64: 1, 1>, scalar_prefetch = 0 : i64, scratch_operands = 1 : i64, tpu.core_type = #tpu.core_type<tc>, window_params = [{transform_indices = @transform_0, window_bounds = array<i64: 16, 32>}, {transform_indices = @transform_1, window_bounds = array<i64: 16, 32>}, {pipeline_mode = #tpu.pipeline_mode<synchronous>, transform_indices = @transform_2, window_bounds = array<i64: 1, 32>}, {pipeline_mode = #tpu.pipeline_mode<synchronous>, transform_indices = @transform_3, window_bounds = array<i64: 1, 32>}, {transform_indices = @transform_4, window_bounds = array<i64: 32, 32>}, {transform_indices = @transform_5, window_bounds = array<i64: 1, 32>}, {transform_indices = @transform_6, window_bounds = array<i64: 16, 32>}]} {
    %c0_i32 = arith.constant 0 : i32
    %0 = arith.cmpi eq, %arg1, %c0_i32 : i32
    %1 = arith.extui %0 : i1 to i32
    %c0_i32_0 = arith.constant 0 : i32
    %2 = arith.cmpi ne, %1, %c0_i32_0 : i32
    scf.if %2 {
      %c0_10 = arith.constant 0 : index
      %c0_11 = arith.constant 0 : index
      %12 = vector.load %arg2[%c0_10, %c0_11] : memref<16x32xf32, #tpu.memory_space<vmem>>, vector<16x32xf32>
      %c0_12 = arith.constant 0 : index
      %c0_13 = arith.constant 0 : index
      %13 = vector.load %arg4[%c0_12, %c0_13] : memref<1x32xf32, #tpu.memory_space<vmem>>, vector<1x32xf32>
      %c0_14 = arith.constant 0 : index
      %c0_15 = arith.constant 0 : index
      %14 = vector.load %arg5[%c0_14, %c0_15] : memref<1x32xf32, #tpu.memory_space<vmem>>, vector<1x32xf32>
      %cst_16 = arith.constant dense<0.000000e+00> : vector<16xf32>
      %15 = vector.multi_reduction <add>, %12, %cst_16 [1] : vector<16x32xf32> to vector<16xf32>
      %16 = vector.shape_cast %15 : vector<16xf32> to vector<16x1xf32>
      %cst_17 = arith.constant 3.200000e+01 : f32
      %17 = vector.broadcast %cst_17 : f32 to vector<16x1xf32>
      %18 = arith.divf %16, %17 : vector<16x1xf32>
      %19 = vector.broadcast %18 : vector<16x1xf32> to vector<16x32xf32>
      %20 = arith.subf %12, %19 : vector<16x32xf32>
      %21 = arith.mulf %20, %20 : vector<16x32xf32>
      %cst_18 = arith.constant dense<0.000000e+00> : vector<16xf32>
      %22 = vector.multi_reduction <add>, %21, %cst_18 [1] : vector<16x32xf32> to vector<16xf32>
      %23 = vector.shape_cast %22 : vector<16xf32> to vector<16x1xf32>
      %cst_19 = arith.constant 3.100000e+01 : f32
      %24 = vector.broadcast %cst_19 : f32 to vector<16x1xf32>
      %25 = arith.divf %23, %24 : vector<16x1xf32>
      %26 = math.sqrt %25 : vector<16x1xf32>
      %27 = vector.broadcast %13 : vector<1x32xf32> to vector<16x32xf32>
      %28 = arith.mulf %27, %20 : vector<16x32xf32>
      %cst_20 = arith.constant 9.99999997E-7 : f32
      %29 = vector.broadcast %cst_20 : f32 to vector<16x1xf32>
      %30 = arith.addf %26, %29 : vector<16x1xf32>
      %31 = vector.broadcast %30 : vector<16x1xf32> to vector<16x32xf32>
      %32 = arith.divf %28, %31 : vector<16x32xf32>
      %33 = vector.broadcast %14 : vector<1x32xf32> to vector<16x32xf32>
      %34 = arith.addf %32, %33 : vector<16x32xf32>
      %c0_21 = arith.constant 0 : index
      %c0_22 = arith.constant 0 : index
      %35 = vector.load %arg9[%c0_21, %c0_22] : memref<16x32xf32, #tpu.memory_space<vmem>>, vector<16x32xf32>
      tpu.vector_store %arg9[%c0_21, %c0_22], %34 {strides = array<i32>} : memref<16x32xf32, #tpu.memory_space<vmem>>, vector<16x32xf32>,
    } else {
    }
    %c0 = arith.constant 0 : index
    %c0_1 = arith.constant 0 : index
    %3 = vector.load %arg9[%c0, %c0_1] : memref<16x32xf32, #tpu.memory_space<vmem>>, vector<16x32xf32>
    %c0_2 = arith.constant 0 : index
    %c0_3 = arith.constant 0 : index
    %4 = vector.load %arg6[%c0_2, %c0_3] : memref<32x32xf32, #tpu.memory_space<vmem>>, vector<32x32xf32>
    %cst = arith.constant dense<0.000000e+00> : vector<16x32xf32>
    %5 = tpu.matmul %3, %4, %cst {dimension_numbers = #tpu.dot_dimension_numbers<[1], [0], [0], [1], [0, 0, 1, 1], [], []>} : vector<16x32xf32>, vector<32x32xf32>, vector<16x32xf32> -> vector<16x32xf32>
    %c0_4 = arith.constant 0 : index
    %c0_5 = arith.constant 0 : index
    %6 = vector.load %arg7[%c0_4, %c0_5] : memref<1x32xf32, #tpu.memory_space<vmem>>, vector<1x32xf32>
    %7 = vector.broadcast %6 : vector<1x32xf32> to vector<16x32xf32>
    %8 = arith.addf %5, %7 : vector<16x32xf32>
    %c0_6 = arith.constant 0 : index
    %c0_7 = arith.constant 0 : index
    %9 = vector.load %arg3[%c0_6, %c0_7] : memref<16x32xf32, #tpu.memory_space<vmem>>, vector<16x32xf32>
    %10 = arith.addf %9, %8 : vector<16x32xf32>
    %c0_8 = arith.constant 0 : index
    %c0_9 = arith.constant 0 : index
    %11 = vector.load %arg8[%c0_8, %c0_9] : memref<16x32xf32, #tpu.memory_space<vmem>>, vector<16x32xf32>
    tpu.vector_store %arg8[%c0_8, %c0_9], %10 {strides = array<i32>} : memref<16x32xf32, #tpu.memory_space<vmem>>, vector<16x32xf32>,
    return
  }
  func.func @transform_0(%arg0: i32, %arg1: i32) -> (i32, i32) {
    %c0_i32 = arith.constant 0 : i32
    %c0_i32_0 = arith.constant 0 : i32
    return %arg0, %c0_i32 : i32, i32
  }
  func.func @transform_1(%arg0: i32, %arg1: i32) -> (i32, i32) {
    %c0_i32 = arith.constant 0 : i32
    return %arg0, %arg1 : i32, i32
  }
  func.func @transform_2(%arg0: i32, %arg1: i32) -> (i32, i32) {
    %c0_i32 = arith.constant 0 : i32
    %c0_i32_0 = arith.constant 0 : i32
    %c0_i32_1 = arith.constant 0 : i32
    return %c0_i32, %c0_i32_0 : i32, i32
  }
  func.func @transform_3(%arg0: i32, %arg1: i32) -> (i32, i32) {
    %c0_i32 = arith.constant 0 : i32
    %c0_i32_0 = arith.constant 0 : i32
    %c0_i32_1 = arith.constant 0 : i32
    return %c0_i32, %c0_i32_0 : i32, i32
  }
  func.func @transform_4(%arg0: i32, %arg1: i32) -> (i32, i32) {
    %c0_i32 = arith.constant 0 : i32
    %c0_i32_0 = arith.constant 0 : i32
    return %c0_i32, %arg1 : i32, i32
  }
  func.func @transform_5(%arg0: i32, %arg1: i32) -> (i32, i32) {
    %c0_i32 = arith.constant 0 : i32
    %c0_i32_0 = arith.constant 0 : i32
    return %c0_i32, %arg1 : i32, i32
  }
  func.func @transform_6(%arg0: i32, %arg1: i32) -> (i32, i32) {
    %c0_i32 = arith.constant 0 : i32
    return %arg0, %arg1 : i32, i32
  }
}

</mosaic_0001>

<llo_original>
// kernel: sublayer_connection_linear.1
$region0: #{sublayer_connection_linear.1}
  #allocation0 [shape = 'u32[]', space=smem, size = 0x4, offset = 0x4, fixed_abs, tag = 'smem constant byte address 0x4 - core index']
  #allocation1 [shape = 'u32[144,128]{1,0:T(1,128)}', space=vmem, size = 0x12000, scoped, tag = 'internal scratch']
  #allocation2 [shape = 'f32[16,32]{1,0:T(8,128)}', space=vmem, size = 0x2000, scoped, tag = 'scratch operand']
  %s0 = inlined_call_operand.hbm [shape: f32[16,32], index: 0, kind: input, shape index: {}, may-alias: {0,1}]
  %s1 = inlined_call_operand.hbm [shape: f32[16,32], index: 1, kind: input, shape index: {}, may-alias: {0,1}]
  %s2 = inlined_call_operand.vmem [shape: f32[1,32], index: 2, kind: input, shape index: {}]
  %s3 = inlined_call_operand.vmem [shape: f32[1,32], index: 3, kind: input, shape index: {}]
  %s4 = inlined_call_operand.hbm [shape: f32[32,32], index: 4, kind: input, shape index: {}]
  %s5 = inlined_call_operand.vmem [shape: f32[1,32], index: 5, kind: input, shape index: {}]
  %s6 = inlined_call_operand.hbm [shape: f32[16,32], index: 6, kind: output, shape index: {}]
  %s7 = sld [smem:[#allocation0]]
  $region50: #{sublayer_connection_linear.1} parent=0
    _
  %s9 = ssub.s32 1, %s7
  %s10 = scalar_select 0, %s9, %s7
  $region1: #{sublayer_connection_linear.1} parent=0
    #allocation3 [shape = 'u8[8192]{0}', space=vmem, size = 0x2000, scoped, tag = 'input window, operand 0, single buffered']
    #allocation4 [shape = 's32[1]{0}', space=sflag, size = 0x4, scoped, tag = 'scoped memory for sublayer_connection_linear.1']
    #allocation5 [shape = 's32[1]{0}', space=sflag, size = 0x4, scoped, tag = 'scoped memory for sublayer_connection_linear.1']
    #allocation6 [shape = 'u8[8192]{0}', space=vmem, size = 0x2000, scoped, tag = 'input window, operand 1, single buffered']
    #allocation7 [shape = 's32[1]{0}', space=sflag, size = 0x4, scoped, tag = 'scoped memory for sublayer_connection_linear.1']
    #allocation8 [shape = 'u8[16384]{0}', space=vmem, size = 0x4000, scoped, tag = 'input window, operand 4, single buffered']
    #allocation9 [shape = 'u8[8192]{0}', space=vmem, size = 0x2000, scoped, tag = 'output window, operand 0, single buffered']
    %11 = vsyncpa [#allocation4], 0
    %12 = vsyncpa [#allocation7], 0
    %13 = vsyncpa [#allocation5], 0
    // Predicated region
    $region2: #{sublayer_connection_linear.1} parent=1 // pred_check
      _
    $region3: #{sublayer_connection_linear.1} parent=1 // pred_check_branch
      %15 = sbr.rel (0) target = $region5
    $region4: #{sublayer_connection_linear.1} parent=1 // pred_region
      %s17 = ssub.s32 256, 256
      %18 = vsyncadd [#allocation4], %s17
      %s19 = sshll.u32 [#allocation3], 4
      %s20 = int_to_ptr.vmem [resolvable:$true] %s19
      %25 = dma.hbm_to_vmem [thread:$0]  %s0, 256, %s20, [#allocation4], 128, 128, 8
    $region5: #{sublayer_connection_linear.1} parent=1 // pred_fallthru
      _
    // Predicated region
    $region6: #{sublayer_connection_linear.1} parent=1 // pred_check
      _
    $region7: #{sublayer_connection_linear.1} parent=1 // pred_check_branch
      %27 = sbr.rel (0) target = $region9
    $region8: #{sublayer_connection_linear.1} parent=1 // pred_region
      %s29 = ssub.s32 256, 256
      %30 = vsyncadd [#allocation7], %s29
      %s31 = sshll.u32 [#allocation6], 4
      %s32 = int_to_ptr.vmem [resolvable:$true] %s31
      %37 = dma.hbm_to_vmem [thread:$0]  %s1, 256, %s32, [#allocation7], 128, 128, 8
    $region9: #{sublayer_connection_linear.1} parent=1 // pred_fallthru
      _
    // Predicated region
    $region10: #{sublayer_connection_linear.1} parent=1 // pred_check
      _
    $region11: #{sublayer_connection_linear.1} parent=1 // pred_check_branch
      %39 = sbr.rel (0) target = $region13
    $region12: #{sublayer_connection_linear.1} parent=1 // pred_region
      _
    $region13: #{sublayer_connection_linear.1} parent=1 // pred_fallthru
      _
    // Predicated region
    $region14: #{sublayer_connection_linear.1} parent=1 // pred_check
      _
    $region15: #{sublayer_connection_linear.1} parent=1 // pred_check_branch
      %41 = sbr.rel (0) target = $region17
    $region16: #{sublayer_connection_linear.1} parent=1 // pred_region
      _
    $region17: #{sublayer_connection_linear.1} parent=1 // pred_fallthru
      _
    // Predicated region
    $region18: #{sublayer_connection_linear.1} parent=1 // pred_check
      _
    $region19: #{sublayer_connection_linear.1} parent=1 // pred_check_branch
      %43 = sbr.rel (0) target = $region21
    $region20: #{sublayer_connection_linear.1} parent=1 // pred_region
      %s45 = ssub.s32 512, 512
      %46 = vsyncadd [#allocation7], %s45
      %s47 = sshll.u32 [#allocation8], 4
      %s48 = int_to_ptr.vmem [resolvable:$true] %s47
      %53 = dma.hbm_to_vmem [thread:$0]  %s4, 512, %s48, [#allocation7], 128, 128, 8
    $region21: #{sublayer_connection_linear.1} parent=1 // pred_fallthru
      _
    // Predicated region
    $region22: #{sublayer_connection_linear.1} parent=1 // pred_check
      _
    $region23: #{sublayer_connection_linear.1} parent=1 // pred_check_branch
      %55 = sbr.rel (0) target = $region25
    $region24: #{sublayer_connection_linear.1} parent=1 // pred_region
      _
    $region25: #{sublayer_connection_linear.1} parent=1 // pred_fallthru
      _
    // Predicated region
    $region26: #{sublayer_connection_linear.1} parent=1 // pred_check
      _
    $region27: #{sublayer_connection_linear.1} parent=1 // pred_check_branch
      %57 = sbr.rel (0) target = $region29
    $region28: #{sublayer_connection_linear.1} parent=1 // pred_region
      %58 = dma.done [#allocation4], 256
    $region29: #{sublayer_connection_linear.1} parent=1 // pred_fallthru
      _
    // Predicated region
    $region30: #{sublayer_connection_linear.1} parent=1 // pred_check
      _
    $region31: #{sublayer_connection_linear.1} parent=1 // pred_check_branch
      %60 = sbr.rel (0) target = $region33
    $region32: #{sublayer_connection_linear.1} parent=1 // pred_region
      %61 = dma.done [#allocation7], 256
    $region33: #{sublayer_connection_linear.1} parent=1 // pred_fallthru
      _
    // Predicated region
    $region34: #{sublayer_connection_linear.1} parent=1 // pred_check
      _
    $region35: #{sublayer_connection_linear.1} parent=1 // pred_check_branch
      %63 = sbr.rel (0) target = $region37
    $region36: #{sublayer_connection_linear.1} parent=1 // pred_region
      %64 = dma.done [#allocation7], 512
    $region37: #{sublayer_connection_linear.1} parent=1 // pred_fallthru
      _
    %p65 = scmp.eq.s32.totalorder 0, 0
    // Predicated region
    $region38: #{sublayer_connection_linear.1} parent=1 // pred_check
      %p66 = pneg %p65
    $region39: #{sublayer_connection_linear.1} parent=1 // pred_check_branch
      %68 = sbr.rel (%p66) target = $region41
    $region40: #{sublayer_connection_linear.1} parent=1 // pred_region
      %v69 = vld [vmem:[#allocation3] sm:$0xff]
      %v70 = vld [vmem:[#allocation3 + $0x8] sm:$0xff]
      %v71 = vld [vmem:[%s2] sm:$0x1]
      %v72 = vld [vmem:[%s3] sm:$0x1]
      %vm73 = vcmask 261120
      %v74 = vsel %vm73, %v69, 0.0
      %75 = vadd.xlane.f32.xlu0 %v74
      %v76 = vpop.xlane.xlu0 %75
      %v77 = vsel %vm73, %v70, 0.0
      %78 = vadd.xlane.f32.xlu0 %v77
      %v79 = vpop.xlane.xlu0 %78
      %v80 = vrcp.pop 32.0
      %v81 = vmul.f32 %v76, %v80
      %v82 = vmul.f32 %v79, %v80
      %v83 = vsub.f32 %v69, %v81
      %v84 = vsub.f32 %v70, %v82
      %v85 = vmul.f32 %v83, %v83
      %v86 = vmul.f32 %v84, %v84
      %v87 = vsel %vm73, %v85, 0.0
      %88 = vadd.xlane.f32.xlu0 %v87
      %v89 = vpop.xlane.xlu0 %88
      %v90 = vsel %vm73, %v86, 0.0
      %91 = vadd.xlane.f32.xlu0 %v90
      %v92 = vpop.xlane.xlu0 %91
      %v93 = vrcp.pop 31.0
      %v94 = vmul.f32 %v89, %v93
      %v95 = vmul.f32 %v92, %v93
      %v96 = vrsqrt.pop %v94
      %v97 = vmul.f32 %v94, %v96
      %vm98 = vcmp.eq.f32.partialorder %v94, inf
      %v99 = vsel %vm98, %v94, %v97
      %vm100 = vcmp.eq.f32.partialorder %v94, 0.0
      %v101 = vand.u32 %v94, 2147483648
      %v102 = vsel %vm100, %v101, %v99
      %v103 = vrsqrt.pop %v95
      %v104 = vmul.f32 %v95, %v103
      %vm105 = vcmp.eq.f32.partialorder %v95, inf
      %v106 = vsel %vm105, %v95, %v104
      %vm107 = vcmp.eq.f32.partialorder %v95, 0.0
      %v108 = vand.u32 %v95, 2147483648
      %v109 = vsel %vm107, %v108, %v106
      %v111 = vlaneseq
      %v112 = vshrl.u32 %v111, 7
      %v113 = vsub.s32 0, %v112
      %v114 = vrot.slane %v71, %v113
      %v116 = vmul.f32 %v114, %v83
      %v117 = vmul.f32 %v114, %v84
      %v118 = vadd.f32 %v102, 1e-06
      %v119 = vadd.f32 %v109, 1e-06
      %v120 = vrcp.pop %v118
      %v121 = vmul.f32 %v116, %v120
      %v122 = vrcp.pop %v119
      %v123 = vmul.f32 %v117, %v122
      %v125 = vlaneseq
      %v126 = vshrl.u32 %v125, 7
      %v127 = vsub.s32 0, %v126
      %v128 = vrot.slane %v72, %v127
      %v130 = vadd.f32 %v121, %v128
      %v131 = vadd.f32 %v123, %v128
      %132 = vst.msk [vmem:[#allocation2] sm:$0xff] %vm73, %v130
      %133 = vst.msk [vmem:[#allocation2 + $0x8] sm:$0xff] %vm73, %v131
    $region41: #{sublayer_connection_linear.1} parent=1 // pred_fallthru
      _
    %v134 = vld [vmem:[#allocation2] sm:$0xff]
    %v135 = vld [vmem:[#allocation2 + $0x8] sm:$0xff]
    %v136 = vld [vmem:[#allocation8] sm:$0xff]
    %v137 = vld [vmem:[#allocation8 + $0x8] sm:$0xff]
    %v138 = vld [vmem:[#allocation8 + $0x10] sm:$0xff]
    %v139 = vld [vmem:[#allocation8 + $0x18] sm:$0xff]
    %v140 = vld [vmem:[%s5] sm:$0x1]
    %v142 = vlaneseq
    %v143 = vshrl.u32 %v142, 7
    %v144 = vsub.s32 0, %v143
    %v145 = vrot.slane %v140, %v144
    %vm147 = vcmask 261120
    %v149 = vsel %vm147, %v134, 0
    %v152 = vsel %vm147, %v135, 0
    %154 = vmatprep.subr.mxu0 0.0
    %155 = vmatpush1.msra.mxu0 %v136
    %156 = vmatprep.subr.mxu0 0.0
    %157 = vmatpush1.msra.mxu0 %v137
    %158 = vmatprep.subr.mxu0 0.0
    %159 = vmatpush1.msra.mxu0 %v138
    %160 = vmatprep.subr.mxu0 0.0
    %161 = vmatpush1.msra.mxu0 %v139
    %162 = vmatprep.subr.mxu0 0.0
    %163 = vmatpush1.msra.mxu0 0.0
    %164 = vmatprep.subr.mxu0 0.0
    %165 = vmatpush1.msra.mxu0 0.0
    %166 = vmatprep.subr.mxu0 0.0
    %167 = vmatpush1.msra.mxu0 0.0
    %168 = vmatprep.subr.mxu0 0.0
    %169 = vmatpush1.msra.mxu0 0.0
    %170 = vmatprep.subr.mxu0 0.0
    %171 = vmatpush1.msra.mxu0 0.0
    %172 = vmatprep.subr.mxu0 0.0
    %173 = vmatpush1.msra.mxu0 0.0
    %174 = vmatprep.subr.mxu0 0.0
    %175 = vmatpush1.msra.mxu0 0.0
    %176 = vmatprep.subr.mxu0 0.0
    %177 = vmatpush1.msra.mxu0 0.0
    %178 = vmatprep.subr.mxu0 0.0
    %179 = vmatpush1.msra.mxu0 0.0
    %180 = vmatprep.subr.mxu0 0.0
    %181 = vmatpush1.msra.mxu0 0.0
    %182 = vmatprep.subr.mxu0 0.0
    %183 = vmatpush1.msra.mxu0 0.0
    %184 = vmatprep.subr.mxu0 0.0
    %185 = vmatpush1.msra.mxu0 0.0
    %186 = vmatprep.subr.mxu0 0.0
    %187 = vmatpush1.msra.mxu0 0.0
    %188 = vmatprep.subr.mxu0 0.0
    %189 = vmatpush1.msra.mxu0 0.0
    %190 = vmatprep.subr.mxu0 0.0
    %191 = vmatpush1.msra.mxu0 0.0
    %192 = vmatprep.subr.mxu0 0.0
    %193 = vmatpush1.msra.mxu0 0.0
    %194 = vmatprep.subr.mxu0 0.0
    %195 = vmatpush1.msra.mxu0 0.0
    %196 = vmatprep.subr.mxu0 0.0
    %197 = vmatpush1.msra.mxu0 0.0
    %198 = vmatprep.subr.mxu0 0.0
    %199 = vmatpush1.msra.mxu0 0.0
    %200 = vmatprep.subr.mxu0 0.0
    %201 = vmatpush1.msra.mxu0 0.0
    %202 = vmatprep.subr.mxu0 0.0
    %203 = vmatpush1.msra.mxu0 0.0
    %204 = vmatprep.subr.mxu0 0.0
    %205 = vmatpush1.msra.mxu0 0.0
    %206 = vmatprep.subr.mxu0 0.0
    %207 = vmatpush1.msra.mxu0 0.0
    %208 = vmatprep.subr.mxu0 0.0
    %209 = vmatpush1.msra.mxu0 0.0
    %210 = vmatprep.subr.mxu0 0.0
    %211 = vmatpush1.msra.mxu0 0.0
    %212 = vmatprep.subr.mxu0 0.0
    %213 = vmatpush1.msra.mxu0 0.0
    %214 = vmatprep.subr.mxu0 0.0
    %215 = vmatpush1.msra.mxu0 0.0
    %216 = vmatprep.subr.mxu0 0.0
    %217 = vmatpush1.msra.mxu0 0.0
    %218 = vmatprep.mubr.f32.mxu0 0.0
    %219 = vmatmul.mubr.f32.gmra.mrb[0].mxu0 %v149
    %v220 = vpop.f32.mrb[0].mxu0
    %v221 = vadd.f32 %v145, %v220
    %v222 = vpop.f32.mrb[0].mxu0
    %223 = vmatprep.mubr.f32.mxu0 0.0
    %224 = vmatmul.mubr.f32.gmra.mrb[0].mxu0 %v152
    %v225 = vpop.f32.mrb[0].mxu0
    %v226 = vadd.f32 %v145, %v225
    %v227 = vpop.f32.mrb[0].mxu0
    %228 = vdwg.mxu0
    %v229 = vld [vmem:[#allocation6] sm:$0xff]
    %v230 = vld [vmem:[#allocation6 + $0x8] sm:$0xff]
    %v231 = vadd.f32 %v229, %v221
    %v232 = vadd.f32 %v230, %v226
    %233 = vst.msk [vmem:[#allocation9] sm:$0xff] %vm147, %v231
    %234 = vst.msk [vmem:[#allocation9 + $0x8] sm:$0xff] %vm147, %v232
    // Predicated region
    $region42: #{sublayer_connection_linear.1} parent=1 // pred_check
      _
    $region43: #{sublayer_connection_linear.1} parent=1 // pred_check_branch
      %236 = sbr.rel (0) target = $region45
    $region44: #{sublayer_connection_linear.1} parent=1 // pred_region
      %s238 = ssub.s32 256, 256
      %239 = vsyncadd [#allocation5], %s238
      %s240 = sshll.u32 [#allocation9], 4
      %s241 = int_to_ptr.vmem [resolvable:$true] %s240
      %246 = dma.vmem_to_hbm [thread:$0]  %s241, 256, %s6, [#allocation5], 128, 128, 8
    $region45: #{sublayer_connection_linear.1} parent=1 // pred_fallthru
      _
    // Predicated region
    $region46: #{sublayer_connection_linear.1} parent=1 // pred_check
      _
    $region47: #{sublayer_connection_linear.1} parent=1 // pred_check_branch
      %248 = sbr.rel (0) target = $region49
    $region48: #{sublayer_connection_linear.1} parent=1 // pred_region
      %249 = dma.done [#allocation5], 256
    $region49: #{sublayer_connection_linear.1} parent=1 // pred_fallthru
      _
    %250 = vsyncpa [#allocation4], 1
    %251 = vsyncpa [#allocation7], 1
    %252 = vsyncpa [#allocation5], 1

</llo_original>
